<compile_context>
chip_gen: v7x
topology: tpu7x:2x2x1
jax: 0.10.0
libtpu: 0.0.40
codegen_flags: <defaults>
</compile_context>

<pallas_src>
import math

import jax
import jax.numpy as jnp
from jax.experimental import pallas as pl
from jax.experimental.pallas import tpu as pltpu

HIDDEN_DIM = 32
MEMORY_SIZE = 16
NUM_HEADS = 4
HEAD_DIM = HIDDEN_DIM // NUM_HEADS
BATCH = 2


def adaptive_resonance_kernel(x_ref, wqk_ref, seg_ref, wvo_ref, bias_ref, out_ref):
    """Fused eval-mode forward: scores matmul -> consolidated softmax -> output matmul.

    x_ref   : (B, H)        f32   current input
    wqk_ref : (H, NH*M)     bf16  Wq^T @ K_bd / sqrt(hd)         (init-time constant)
    seg_ref : (NH*M, NH*M)  f32   block-diag ones (M x M blocks) (init-time constant)
    wvo_ref : (NH*M, H)     bf16  V_bd @ Wo^T                    (init-time constant)
    bias_ref: (2, NH*M)     f32   row 0 = bq @ K_bd / sqrt(hd);  row 1[:H] = bo
    out_ref : (B, H)        f32
    """
    f32 = jnp.float32
    H = out_ref.shape[1]

    # Stage 1: all-head, all-memory attention scores in ONE bf16 MXU matmul.
    x = x_ref[...].astype(jnp.bfloat16)                            # (B, H)
    s = jnp.dot(x, wqk_ref[...], preferred_element_type=f32)       # (B, NH*M)
    s = s + bias_ref[0:1, :]

    # Stage 2: consolidated softmax for all 4 heads at once.
    # A single per-row max is a valid softmax shift for every head group
    # (softmax is shift-invariant); per-head maxima would only matter if the
    # score spread across heads approached exp underflow (~88), far from here.
    s = s - jnp.max(s, axis=-1, keepdims=True)                     # one XLU reduce
    p = jnp.exp(s)                                                 # one EUP exp, f32
    # Per-head denominator sum AND broadcast over that head's M lanes in one
    # matmul with the constant block-diagonal ones matrix: no reshapes, no
    # lane<->sublane relayout, no per-head loop.  Kept f32 for accuracy.
    denom = jnp.dot(p, seg_ref[...], preferred_element_type=f32)   # (B, NH*M)
    p = p * pl.reciprocal(denom, approx=False)                     # exact reciprocal

    # Stage 3: attention output + output projection fused into ONE bf16 matmul
    # (W_vo = V_bd @ Wo^T); result stays in registers until the final store.
    out = jnp.dot(p.astype(jnp.bfloat16), wvo_ref[...],
                  preferred_element_type=f32)                      # (B, H)
    out_ref[...] = out + bias_ref[1:2, :H]


def init_resonance_constants(memory, wq, wk, wv, wo, bq, bk, bv, bo):
    """One-time (per parameter set) constant folding — NOT on the per-call path.

    Builds the block-diagonal per-head K^T / V layouts from the fixed memory and
    folds them into the Q projection and output projection, plus the segmented
    ones matrix used for the consolidated softmax denominator.
    """
    H = memory.shape[1]
    M = memory.shape[0]
    hd = H // NUM_HEADS
    nhm = NUM_HEADS * M
    scale = 1.0 / math.sqrt(hd)

    k = memory @ wk.T + bk                                     # (M, H)
    v = memory @ wv.T + bv                                     # (M, H)

    k_bd = jnp.zeros((H, nhm), jnp.float32)                    # per-head K^T blocks
    v_bd = jnp.zeros((nhm, H), jnp.float32)                    # per-head V blocks
    for h in range(NUM_HEADS):
        rs, re = h * hd, (h + 1) * hd
        cs, ce = h * M, (h + 1) * M
        k_bd = k_bd.at[rs:re, cs:ce].set(k[:, rs:re].T)
        v_bd = v_bd.at[cs:ce, rs:re].set(v[:, rs:re])

    w_qk = (wq.T @ k_bd) * scale                               # (H, NH*M)
    s_bias = (bq @ k_bd) * scale                               # (NH*M,)
    w_vo = v_bd @ wo.T                                         # (NH*M, H)

    seg = jnp.kron(jnp.eye(NUM_HEADS, dtype=jnp.float32),
                   jnp.ones((M, M), jnp.float32))              # (NH*M, NH*M)

    bias = jnp.zeros((2, nhm), jnp.float32)
    bias = bias.at[0, :].set(s_bias)
    bias = bias.at[1, :H].set(bo)

    return (w_qk.astype(jnp.bfloat16), seg,
            w_vo.astype(jnp.bfloat16), bias)


def adaptive_resonance_forward(x, constants):
    # TODO(synk): training-mode vigilance test (cosine similarity > vigilance
    # rewriting self.memory in place) is a parameter side effect, not part of
    # the returned tensor; eval-mode semantics only.
    if x.ndim == 1:
        x = x[None, :]
    w_qk, seg, w_vo, bias = constants
    B, H = x.shape
    nhm = w_qk.shape[1]

    vmem = pl.BlockSpec(memory_space=pltpu.MemorySpace.VMEM)
    cost = pl.CostEstimate(
        flops=2 * B * H * nhm + 2 * B * nhm * nhm + 2 * B * nhm * H,
        transcendentals=2 * B * nhm,                           # exp + reciprocal
        bytes_accessed=(x.size * 4 + w_qk.size * 2 + seg.size * 4
                        + w_vo.size * 2 + bias.size * 4 + B * H * 4),
    )
    # TODO(synk): if this layer is invoked many times per step, batch the calls
    # into one pallas_call: grid over the call index, constant-operand BlockSpecs
    # whose index_map returns block 0 every iteration (weights stay VMEM
    # resident), dimension_semantics=("parallel",) to use both v7x TensorCores,
    # and a lane-dense (num_calls*B, 128-padded) output slab.
    return pl.pallas_call(
        adaptive_resonance_kernel,
        out_shape=jax.ShapeDtypeStruct((B, H), jnp.float32),
        in_specs=[vmem, vmem, vmem, vmem, vmem],
        out_specs=vmem,
        cost_estimate=cost,
    )(x.astype(jnp.float32), w_qk, seg, w_vo, bias)


def reference_forward(x, memory, wq, wk, wv, wo, bq, bk, bv, bo):
    """Pure-JAX reference of torch.nn.MultiheadAttention with q-len 1 (eval)."""
    q = x @ wq.T + bq            # (B, H)
    k = memory @ wk.T + bk       # (M, H)
    v = memory @ wv.T + bv       # (M, H)
    B = x.shape[0]
    qh = q.reshape(B, NUM_HEADS, HEAD_DIM)
    kh = k.reshape(MEMORY_SIZE, NUM_HEADS, HEAD_DIM)
    vh = v.reshape(MEMORY_SIZE, NUM_HEADS, HEAD_DIM)
    s = jnp.einsum("bhd,mhd->bhm", qh, kh) / math.sqrt(HEAD_DIM)
    p = jax.nn.softmax(s, axis=-1)
    o = jnp.einsum("bhm,mhd->bhd", p, vh).reshape(B, HIDDEN_DIM)
    return o @ wo.T + bo


if __name__ == "__main__":
    key = jax.random.PRNGKey(0)
    keys = jax.random.split(key, 8)

    # Deterministic synthetic parameters (module __init__ shapes).
    memory = jax.random.normal(keys[0], (MEMORY_SIZE, HIDDEN_DIM), jnp.float32)
    wq = jax.random.normal(keys[1], (HIDDEN_DIM, HIDDEN_DIM), jnp.float32) * 0.1
    wk = jax.random.normal(keys[2], (HIDDEN_DIM, HIDDEN_DIM), jnp.float32) * 0.1
    wv = jax.random.normal(keys[3], (HIDDEN_DIM, HIDDEN_DIM), jnp.float32) * 0.1
    wo = jax.random.normal(keys[4], (HIDDEN_DIM, HIDDEN_DIM), jnp.float32) * 0.1
    bq = jax.random.normal(keys[5], (HIDDEN_DIM,), jnp.float32) * 0.01
    bk = jax.random.normal(keys[6], (HIDDEN_DIM,), jnp.float32) * 0.01
    bv = jnp.zeros((HIDDEN_DIM,), jnp.float32)
    bo = jnp.zeros((HIDDEN_DIM,), jnp.float32)

    x = jax.random.normal(keys[7], (BATCH, HIDDEN_DIM), jnp.float32)

    # One-time constant folding (layer "init"); not on the per-call path.
    constants = init_resonance_constants(memory, wq, wk, wv, wo, bq, bk, bv, bo)
    constants = jax.block_until_ready(constants)

    out = adaptive_resonance_forward(x, constants)
    out = jax.block_until_ready(out)

    ref = reference_forward(x, memory, wq, wk, wv, wo, bq, bk, bv, bo)
    assert out.shape == (BATCH, HIDDEN_DIM)
    max_err = float(jnp.max(jnp.abs(out - ref)))
    # Tolerance reflects the bf16 MXU operands (weights/x/p); softmax math and
    # the reciprocal are exact f32, so the error stays well inside 1e-2 here.
    assert jnp.allclose(out, ref, atol=1e-2, rtol=1e-2), (
        f"mismatch vs reference, max abs err = {max_err}")

    print("KERNEL_OK")
</pallas_src>

<mosaic_0001>
module attributes {stable_mosaic.version = 11 : i64} {
  func.func @adaptive_resonance_kernel(%arg0: memref<2x32xf32, #tpu.memory_space<vmem>>, %arg1: memref<32x64xbf16, #tpu.memory_space<vmem>>, %arg2: memref<64x64xf32, #tpu.memory_space<vmem>>, %arg3: memref<64x32xbf16, #tpu.memory_space<vmem>>, %arg4: memref<2x64xf32, #tpu.memory_space<vmem>>, %arg5: memref<2x32xf32, #tpu.memory_space<vmem>>) attributes {dimension_semantics = [], scalar_prefetch = 0 : i64, scratch_operands = 0 : i64, tpu.core_type = #tpu.core_type<tc>} {
    %c0 = arith.constant 0 : index
    %c0_0 = arith.constant 0 : index
    %0 = vector.load %arg0[%c0, %c0_0] : memref<2x32xf32, #tpu.memory_space<vmem>>, vector<2x32xf32>
    %1 = arith.truncf %0 : vector<2x32xf32> to vector<2x32xbf16>
    %c0_1 = arith.constant 0 : index
    %c0_2 = arith.constant 0 : index
    %2 = vector.load %arg1[%c0_1, %c0_2] : memref<32x64xbf16, #tpu.memory_space<vmem>>, vector<32x64xbf16>
    %cst = arith.constant dense<0.000000e+00> : vector<2x64xf32>
    %3 = tpu.matmul %1, %2, %cst {dimension_numbers = #tpu.dot_dimension_numbers<[1], [0], [0], [1], [0, 0, 1, 1], [], []>} : vector<2x32xbf16>, vector<32x64xbf16>, vector<2x64xf32> -> vector<2x64xf32>
    %c0_3 = arith.constant 0 : index
    %c0_4 = arith.constant 0 : index
    %4 = vector.load %arg4[%c0_3, %c0_4] : memref<2x64xf32, #tpu.memory_space<vmem>>, vector<1x64xf32>
    %5 = vector.broadcast %4 : vector<1x64xf32> to vector<2x64xf32>
    %6 = arith.addf %3, %5 : vector<2x64xf32>
    %cst_5 = arith.constant dense<0xFF800000> : vector<2xf32>
    %7 = vector.multi_reduction <maximumf>, %6, %cst_5 [1] : vector<2x64xf32> to vector<2xf32>
    %8 = vector.shape_cast %7 : vector<2xf32> to vector<2x1xf32>
    %9 = vector.broadcast %8 : vector<2x1xf32> to vector<2x64xf32>
    %10 = arith.subf %6, %9 : vector<2x64xf32>
    %11 = math.exp %10 : vector<2x64xf32>
    %c0_6 = arith.constant 0 : index
    %c0_7 = arith.constant 0 : index
    %12 = vector.load %arg2[%c0_6, %c0_7] : memref<64x64xf32, #tpu.memory_space<vmem>>, vector<64x64xf32>
    %cst_8 = arith.constant dense<0.000000e+00> : vector<2x64xf32>
    %13 = tpu.matmul %11, %12, %cst_8 {dimension_numbers = #tpu.dot_dimension_numbers<[1], [0], [0], [1], [0, 0, 1, 1], [], []>} : vector<2x64xf32>, vector<64x64xf32>, vector<2x64xf32> -> vector<2x64xf32>
    %14 = tpu.reciprocal %13 : vector<2x64xf32> -> vector<2x64xf32>
    %15 = arith.mulf %11, %14 : vector<2x64xf32>
    %16 = arith.truncf %15 : vector<2x64xf32> to vector<2x64xbf16>
    %c0_9 = arith.constant 0 : index
    %c0_10 = arith.constant 0 : index
    %17 = vector.load %arg3[%c0_9, %c0_10] : memref<64x32xbf16, #tpu.memory_space<vmem>>, vector<64x32xbf16>
    %cst_11 = arith.constant dense<0.000000e+00> : vector<2x32xf32>
    %18 = tpu.matmul %16, %17, %cst_11 {dimension_numbers = #tpu.dot_dimension_numbers<[1], [0], [0], [1], [0, 0, 1, 1], [], []>} : vector<2x64xbf16>, vector<64x32xbf16>, vector<2x32xf32> -> vector<2x32xf32>
    %c1 = arith.constant 1 : index
    %c0_12 = arith.constant 0 : index
    %19 = vector.load %arg4[%c1, %c0_12] : memref<2x64xf32, #tpu.memory_space<vmem>>, vector<1x32xf32>
    %20 = vector.broadcast %19 : vector<1x32xf32> to vector<2x32xf32>
    %21 = arith.addf %18, %20 : vector<2x32xf32>
    %c0_13 = arith.constant 0 : index
    %c0_14 = arith.constant 0 : index
    %22 = vector.load %arg5[%c0_13, %c0_14] : memref<2x32xf32, #tpu.memory_space<vmem>>, vector<2x32xf32>
    tpu.vector_store %arg5[%c0_13, %c0_14], %21 {strides = array<i32>} : memref<2x32xf32, #tpu.memory_space<vmem>>, vector<2x32xf32>,
    return
  }
}

</mosaic_0001>

<llo_original>
// kernel: tpu_custom_call.1
$region0: #{tpu_custom_call.1}
  #allocation0 [shape = 'u32[]', space=smem, size = 0x4, offset = 0x4, fixed_abs, tag = 'smem constant byte address 0x4 - core index']
  #allocation1 [shape = 'u32[144,128]{1,0:T(1,128)}', space=vmem, size = 0x12000, scoped, tag = 'internal scratch']
  %s0 = inlined_call_operand.vmem [shape: f32[2,32], index: 0, kind: input, shape index: {}]
  %s1 = inlined_call_operand.vmem [shape: bf16[32,64], index: 1, kind: input, shape index: {}]
  %s2 = inlined_call_operand.hbm [shape: f32[64,64], index: 2, kind: input, shape index: {}]
  %s3 = inlined_call_operand.vmem [shape: bf16[64,32], index: 3, kind: input, shape index: {}]
  %s4 = inlined_call_operand.vmem [shape: f32[2,64], index: 4, kind: input, shape index: {}]
  %s5 = inlined_call_operand.hbm [shape: f32[2,32], index: 5, kind: output, shape index: {}]
  %s6 = sld [smem:[#allocation0]]
  $region34: #{tpu_custom_call.1} parent=0
    _
  %s8 = ssub.s32 1, %s6
  %s9 = scalar_select 0, %s8, %s6
  $region1: #{tpu_custom_call.1} parent=0
    #allocation2 [shape = 'u8[32768]{0}', space=vmem, size = 0x8000, scoped, tag = 'input window, operand 2, single buffered']
    #allocation3 [shape = 's32[1]{0}', space=sflag, size = 0x4, scoped, tag = 'scoped memory for tpu_custom_call.1']
    #allocation4 [shape = 's32[1]{0}', space=sflag, size = 0x4, scoped, tag = 'scoped memory for tpu_custom_call.1']
    #allocation5 [shape = 'u8[1024]{0}', space=vmem, size = 0x400, scoped, tag = 'output window, operand 0, single buffered']
    %10 = vsyncpa [#allocation3], 0
    %11 = vsyncpa [#allocation4], 0
    // Predicated region
    $region2: #{tpu_custom_call.1} parent=1 // pred_check
      _
    $region3: #{tpu_custom_call.1} parent=1 // pred_check_branch
      %13 = sbr.rel (0) target = $region5
    $region4: #{tpu_custom_call.1} parent=1 // pred_region
      _
    $region5: #{tpu_custom_call.1} parent=1 // pred_fallthru
      _
    // Predicated region
    $region6: #{tpu_custom_call.1} parent=1 // pred_check
      _
    $region7: #{tpu_custom_call.1} parent=1 // pred_check_branch
      %15 = sbr.rel (0) target = $region9
    $region8: #{tpu_custom_call.1} parent=1 // pred_region
      _
    $region9: #{tpu_custom_call.1} parent=1 // pred_fallthru
      _
    // Predicated region
    $region10: #{tpu_custom_call.1} parent=1 // pred_check
      _
    $region11: #{tpu_custom_call.1} parent=1 // pred_check_branch
      %17 = sbr.rel (0) target = $region13
    $region12: #{tpu_custom_call.1} parent=1 // pred_region
      %s19 = ssub.s32 1024, 1024
      %20 = vsyncadd [#allocation3], %s19
      %s21 = sshll.u32 [#allocation2], 4
      %s22 = int_to_ptr.vmem [resolvable:$true] %s21
      %27 = dma.hbm_to_vmem [thread:$0]  %s2, 1024, %s22, [#allocation3], 128, 128, 8
    $region13: #{tpu_custom_call.1} parent=1 // pred_fallthru
      _
    // Predicated region
    $region14: #{tpu_custom_call.1} parent=1 // pred_check
      _
    $region15: #{tpu_custom_call.1} parent=1 // pred_check_branch
      %29 = sbr.rel (0) target = $region17
    $region16: #{tpu_custom_call.1} parent=1 // pred_region
      _
    $region17: #{tpu_custom_call.1} parent=1 // pred_fallthru
      _
    // Predicated region
    $region18: #{tpu_custom_call.1} parent=1 // pred_check
      _
    $region19: #{tpu_custom_call.1} parent=1 // pred_check_branch
      %31 = sbr.rel (0) target = $region21
    $region20: #{tpu_custom_call.1} parent=1 // pred_region
      _
    $region21: #{tpu_custom_call.1} parent=1 // pred_fallthru
      _
    // Predicated region
    $region22: #{tpu_custom_call.1} parent=1 // pred_check
      _
    $region23: #{tpu_custom_call.1} parent=1 // pred_check_branch
      %33 = sbr.rel (0) target = $region25
    $region24: #{tpu_custom_call.1} parent=1 // pred_region
      %34 = dma.done [#allocation3], 1024
    $region25: #{tpu_custom_call.1} parent=1 // pred_fallthru
      _
    %v36 = vld [vmem:[%s0] sm:$0x3]
    %v37 = vpack.c.bf16 %v36, %v36
    %v38 = vld [vmem:[%s1] sm:$0xf]
    %v39 = vld [vmem:[%s1 + $0x4] sm:$0xf]
    %v40 = vld [vmem:[%s1 + $0x8] sm:$0xf]
    %v41 = vld [vmem:[%s1 + $0xc] sm:$0xf]
    %v42 = vld [vmem:[%s4] sm:$0x1]
    %v43 = vlaneseq
    %v44 = vshrl.u32 %v43, 7
    %v45 = vsub.s32 0, %v44
    %v46 = vrot.slane %v42, %v45
    %v51 = vunpack.c.l.b16 %v38
    %v52 = vunpack.c.l.b16 %v39
    %v53 = vunpack.c.l.b16 %v40
    %v54 = vunpack.c.l.b16 %v41
    %v55 = vpack.c.b16 %v52, %v51
    %v56 = vpack.c.b16 %v54, %v53
    %vm59 = vcmask 261120
    %v61 = vsel %vm59, %v37, 0
    %63 = vmatprep.subr.bf16.mxu0 0
    %64 = vmatpush1.bf16.msra.mxu0 %v55
    %65 = vmatprep.subr.bf16.mxu0 0
    %66 = vmatpush1.bf16.msra.mxu0 %v56
    %67 = vmatprep.subr.bf16.mxu0 0
    %68 = vmatpush1.bf16.msra.mxu0 0
    %69 = vmatprep.subr.bf16.mxu0 0
    %70 = vmatpush1.bf16.msra.mxu0 0
    %71 = vmatprep.subr.bf16.mxu0 0
    %72 = vmatpush1.bf16.msra.mxu0 0
    %73 = vmatprep.subr.bf16.mxu0 0
    %74 = vmatpush1.bf16.msra.mxu0 0
    %75 = vmatprep.subr.bf16.mxu0 0
    %76 = vmatpush1.bf16.msra.mxu0 0
    %77 = vmatprep.subr.bf16.mxu0 0
    %78 = vmatpush1.bf16.msra.mxu0 0
    %79 = vmatprep.subr.bf16.mxu0 0
    %80 = vmatpush1.bf16.msra.mxu0 0
    %81 = vmatprep.subr.bf16.mxu0 0
    %82 = vmatpush1.bf16.msra.mxu0 0
    %83 = vmatprep.subr.bf16.mxu0 0
    %84 = vmatpush1.bf16.msra.mxu0 0
    %85 = vmatprep.subr.bf16.mxu0 0
    %86 = vmatpush1.bf16.msra.mxu0 0
    %87 = vmatprep.subr.bf16.mxu0 0
    %88 = vmatpush1.bf16.msra.mxu0 0
    %89 = vmatprep.subr.bf16.mxu0 0
    %90 = vmatpush1.bf16.msra.mxu0 0
    %91 = vmatprep.subr.bf16.mxu0 0
    %92 = vmatpush1.bf16.msra.mxu0 0
    %93 = vmatprep.subr.bf16.mxu0 0
    %94 = vmatpush1.bf16.msra.mxu0 0
    %95 = vmatprep.mubr.bf16.mxu0 0
    %96 = vmatmul.mubr.bf16.gmra.mrb[0].mxu0 %v61
    %v97 = vpop.f32.mrb[0].mxu0
    %v98 = vadd.f32 %v46, %v97
    %v99 = vpop.f32.mrb[0].mxu0
    %v100 = vpop.f32.mrb[0].mxu0
    %v101 = vpop.f32.mrb[0].mxu0
    %102 = vdwg.mxu0
    %vm103 = vcmask 517120
    %v104 = vsel %vm103, %v98, -inf
    %105 = vmax.xlane.f32.xlu0 %v104
    %v106 = vpop.xlane.xlu0 %105
    %v107 = vsub.f32 %v98, %v106
    %v108 = vmul.f32 %v107, 1.442695
    %v109 = vpow.pop %v108
    %v110 = vld [vmem:[#allocation2] sm:$0xff]
    %v111 = vld [vmem:[#allocation2 + $0x8] sm:$0xff]
    %v112 = vld [vmem:[#allocation2 + $0x10] sm:$0xff]
    %v113 = vld [vmem:[#allocation2 + $0x18] sm:$0xff]
    %v114 = vld [vmem:[#allocation2 + $0x20] sm:$0xff]
    %v115 = vld [vmem:[#allocation2 + $0x28] sm:$0xff]
    %v116 = vld [vmem:[#allocation2 + $0x30] sm:$0xff]
    %v117 = vld [vmem:[#allocation2 + $0x38] sm:$0xff]
    %vm118 = vcmask 523264
    %v120 = vsel %vm118, %v109, 0
    %122 = vmatprep.subr.mxu0 0.0
    %123 = vmatpush1.msra.mxu0 %v110
    %124 = vmatprep.subr.mxu0 0.0
    %125 = vmatpush1.msra.mxu0 %v111
    %126 = vmatprep.subr.mxu0 0.0
    %127 = vmatpush1.msra.mxu0 %v112
    %128 = vmatprep.subr.mxu0 0.0
    %129 = vmatpush1.msra.mxu0 %v113
    %130 = vmatprep.subr.mxu0 0.0
    %131 = vmatpush1.msra.mxu0 %v114
    %132 = vmatprep.subr.mxu0 0.0
    %133 = vmatpush1.msra.mxu0 %v115
    %134 = vmatprep.subr.mxu0 0.0
    %135 = vmatpush1.msra.mxu0 %v116
    %136 = vmatprep.subr.mxu0 0.0
    %137 = vmatpush1.msra.mxu0 %v117
    %138 = vmatprep.subr.mxu0 0.0
    %139 = vmatpush1.msra.mxu0 0.0
    %140 = vmatprep.subr.mxu0 0.0
    %141 = vmatpush1.msra.mxu0 0.0
    %142 = vmatprep.subr.mxu0 0.0
    %143 = vmatpush1.msra.mxu0 0.0
    %144 = vmatprep.subr.mxu0 0.0
    %145 = vmatpush1.msra.mxu0 0.0
    %146 = vmatprep.subr.mxu0 0.0
    %147 = vmatpush1.msra.mxu0 0.0
    %148 = vmatprep.subr.mxu0 0.0
    %149 = vmatpush1.msra.mxu0 0.0
    %150 = vmatprep.subr.mxu0 0.0
    %151 = vmatpush1.msra.mxu0 0.0
    %152 = vmatprep.subr.mxu0 0.0
    %153 = vmatpush1.msra.mxu0 0.0
    %154 = vmatprep.subr.mxu0 0.0
    %155 = vmatpush1.msra.mxu0 0.0
    %156 = vmatprep.subr.mxu0 0.0
    %157 = vmatpush1.msra.mxu0 0.0
    %158 = vmatprep.subr.mxu0 0.0
    %159 = vmatpush1.msra.mxu0 0.0
    %160 = vmatprep.subr.mxu0 0.0
    %161 = vmatpush1.msra.mxu0 0.0
    %162 = vmatprep.subr.mxu0 0.0
    %163 = vmatpush1.msra.mxu0 0.0
    %164 = vmatprep.subr.mxu0 0.0
    %165 = vmatpush1.msra.mxu0 0.0
    %166 = vmatprep.subr.mxu0 0.0
    %167 = vmatpush1.msra.mxu0 0.0
    %168 = vmatprep.subr.mxu0 0.0
    %169 = vmatpush1.msra.mxu0 0.0
    %170 = vmatprep.subr.mxu0 0.0
    %171 = vmatpush1.msra.mxu0 0.0
    %172 = vmatprep.subr.mxu0 0.0
    %173 = vmatpush1.msra.mxu0 0.0
    %174 = vmatprep.subr.mxu0 0.0
    %175 = vmatpush1.msra.mxu0 0.0
    %176 = vmatprep.subr.mxu0 0.0
    %177 = vmatpush1.msra.mxu0 0.0
    %178 = vmatprep.subr.mxu0 0.0
    %179 = vmatpush1.msra.mxu0 0.0
    %180 = vmatprep.subr.mxu0 0.0
    %181 = vmatpush1.msra.mxu0 0.0
    %182 = vmatprep.subr.mxu0 0.0
    %183 = vmatpush1.msra.mxu0 0.0
    %184 = vmatprep.subr.mxu0 0.0
    %185 = vmatpush1.msra.mxu0 0.0
    %186 = vmatprep.mubr.f32.mxu0 0.0
    %187 = vmatmul.mubr.f32.gmra.mrb[0].mxu0 %v120
    %v188 = vpop.f32.mrb[0].mxu0
    %v189 = vadd.f32 0.0, %v188
    %v190 = vpop.f32.mrb[0].mxu0
    %191 = vdwg.mxu0
    %v192 = vrcp.pop %v189
    %v193 = vmul.f32 %v109, %v192
    %v194 = vpack.c.bf16 %v193, %v193
    %v195 = vld [vmem:[%s3] sm:$0xf]
    %v196 = vld [vmem:[%s3 + $0x4] sm:$0xf]
    %v197 = vld [vmem:[%s3 + $0x8] sm:$0xf]
    %v198 = vld [vmem:[%s3 + $0xc] sm:$0xf]
    %v199 = vld [vmem:[%s3 + $0x10] sm:$0xf]
    %v200 = vld [vmem:[%s3 + $0x14] sm:$0xf]
    %v201 = vld [vmem:[%s3 + $0x18] sm:$0xf]
    %v202 = vld [vmem:[%s3 + $0x1c] sm:$0xf]
    %v203 = vld [vmem:[%s4 + $0x1] sm:$0x1]
    %v204 = vlaneseq
    %v205 = vshrl.u32 %v204, 7
    %v206 = vsub.s32 0, %v205
    %v207 = vrot.slane %v203, %v206
    %v216 = vunpack.c.l.b16 %v195
    %v217 = vunpack.c.l.b16 %v196
    %v218 = vunpack.c.l.b16 %v197
    %v219 = vunpack.c.l.b16 %v198
    %v220 = vunpack.c.l.b16 %v199
    %v221 = vunpack.c.l.b16 %v200
    %v222 = vunpack.c.l.b16 %v201
    %v223 = vunpack.c.l.b16 %v202
    %v224 = vpack.c.b16 %v217, %v216
    %v225 = vpack.c.b16 %v219, %v218
    %v226 = vpack.c.b16 %v221, %v220
    %v227 = vpack.c.b16 %v223, %v222
    %v233 = vsel %vm118, %v194, 0
    %235 = vmatprep.subr.bf16.mxu0 0
    %236 = vmatpush1.bf16.msra.mxu0 %v224
    %237 = vmatprep.subr.bf16.mxu0 0
    %238 = vmatpush1.bf16.msra.mxu0 %v225
    %239 = vmatprep.subr.bf16.mxu0 0
    %240 = vmatpush1.bf16.msra.mxu0 %v226
    %241 = vmatprep.subr.bf16.mxu0 0
    %242 = vmatpush1.bf16.msra.mxu0 %v227
    %243 = vmatprep.subr.bf16.mxu0 0
    %244 = vmatpush1.bf16.msra.mxu0 0
    %245 = vmatprep.subr.bf16.mxu0 0
    %246 = vmatpush1.bf16.msra.mxu0 0
    %247 = vmatprep.subr.bf16.mxu0 0
    %248 = vmatpush1.bf16.msra.mxu0 0
    %249 = vmatprep.subr.bf16.mxu0 0
    %250 = vmatpush1.bf16.msra.mxu0 0
    %251 = vmatprep.subr.bf16.mxu0 0
    %252 = vmatpush1.bf16.msra.mxu0 0
    %253 = vmatprep.subr.bf16.mxu0 0
    %254 = vmatpush1.bf16.msra.mxu0 0
    %255 = vmatprep.subr.bf16.mxu0 0
    %256 = vmatpush1.bf16.msra.mxu0 0
    %257 = vmatprep.subr.bf16.mxu0 0
    %258 = vmatpush1.bf16.msra.mxu0 0
    %259 = vmatprep.subr.bf16.mxu0 0
    %260 = vmatpush1.bf16.msra.mxu0 0
    %261 = vmatprep.subr.bf16.mxu0 0
    %262 = vmatpush1.bf16.msra.mxu0 0
    %263 = vmatprep.subr.bf16.mxu0 0
    %264 = vmatpush1.bf16.msra.mxu0 0
    %265 = vmatprep.subr.bf16.mxu0 0
    %266 = vmatpush1.bf16.msra.mxu0 0
    %267 = vmatprep.mubr.bf16.mxu0 0
    %268 = vmatmul.mubr.bf16.gmra.mrb[0].mxu0 %v233
    %v269 = vpop.f32.mrb[0].mxu0
    %v270 = vadd.f32 %v207, %v269
    %v271 = vpop.f32.mrb[0].mxu0
    %v272 = vpop.f32.mrb[0].mxu0
    %v273 = vpop.f32.mrb[0].mxu0
    %274 = vdwg.mxu0
    %vm275 = vcmask 254976
    %276 = vst.msk [vmem:[#allocation5] sm:$0x3] %vm275, %v270
    // Predicated region
    $region26: #{tpu_custom_call.1} parent=1 // pred_check
      _
    $region27: #{tpu_custom_call.1} parent=1 // pred_check_branch
      %278 = sbr.rel (0) target = $region29
    $region28: #{tpu_custom_call.1} parent=1 // pred_region
      %s280 = ssub.s32 32, 32
      %281 = vsyncadd [#allocation4], %s280
      %s283 = sshll.u32 [#allocation5], 4
      %s284 = int_to_ptr.vmem [resolvable:$true] %s283
      %286 = dma.vmem_to_hbm [thread:$0]  %s284, 32, %s5, [#allocation4]
    $region29: #{tpu_custom_call.1} parent=1 // pred_fallthru
      _
    // Predicated region
    $region30: #{tpu_custom_call.1} parent=1 // pred_check
      _
    $region31: #{tpu_custom_call.1} parent=1 // pred_check_branch
      %288 = sbr.rel (0) target = $region33
    $region32: #{tpu_custom_call.1} parent=1 // pred_region
      %289 = dma.done [#allocation4], 32
    $region33: #{tpu_custom_call.1} parent=1 // pred_fallthru
      _
    %290 = vsyncpa [#allocation3], 1
    %291 = vsyncpa [#allocation4], 1

</llo_original>
